<compile_context>
chip_gen: v7x
topology: tpu7x:2x2x1
jax: 0.10.0
libtpu: 0.0.40
codegen_flags: <defaults>
</compile_context>

<pallas_src>
import functools

import jax
import jax.numpy as jnp
from jax import lax
from jax.experimental import pallas as pl
from jax.experimental.pallas import tpu as pltpu


def _round_up(x, m):
    return ((x + m - 1) // m) * m


def _vmem_cap_bytes():
    """Generation-aware usable-VMEM cap (v7x: 64 MiB phys; v5e/v6e: 128 MiB)."""
    try:
        phys = int(pltpu.get_tpu_info().vmem_capacity_bytes)
    except Exception:  # non-TPU interpreter / older runtime
        phys = 64 << 20  # be conservative
    # Leave headroom for Mosaic-internal scratch and double-buffer slack.
    return max(32 << 20, min(phys * 3 // 4, 100 << 20))


# ----------------------------------------------------------------------------
# Fused kernel: Linear + online LSE + normalization in one pass.
# Grid = (row tiles [parallel], vocab tiles [arbitrary, innermost]).
# ----------------------------------------------------------------------------
def _fused_proj_logsoftmax_kernel(x_ref, w_ref, b_ref, o_ref,
                                  logits_sc, m_sc, l_sc,
                                  *, vocab, tn, needs_mask):
    j = pl.program_id(1)

    @pl.when(j == 0)
    def _():
        m_sc[...] = jnp.full_like(m_sc, -jnp.inf)
        l_sc[...] = jnp.zeros_like(l_sc)

    # x: (tm, d_model), w: (tn, d_model) -> (tm, tn); contract last dims of
    # both operands so the weight is used as stored (no transpose copy).
    logits = lax.dot_general(
        x_ref[...], w_ref[...],
        dimension_numbers=(((1,), (1,)), ((), ())),
        preferred_element_type=jnp.float32,
    ) + b_ref[...].astype(jnp.float32)
    # Keep the raw f32 logits of this row panel resident in VMEM (no HBM
    # round-trip); one (tm, tn) slab per vocab tile, dynamic leading index.
    logits_sc[j] = logits

    if needs_mask:
        # Exclude padded vocab columns from the softmax statistics.
        col = j * tn + lax.broadcasted_iota(jnp.int32, (1, tn), 1)
        stats = jnp.where(col < vocab, logits, -jnp.inf)
    else:
        stats = logits

    m_prev = m_sc[...]
    m_new = jnp.maximum(m_prev, jnp.max(stats, axis=-1, keepdims=True))
    l_sc[...] = (l_sc[...] * jnp.exp(m_prev - m_new)
                 + jnp.sum(jnp.exp(stats - m_new), axis=-1, keepdims=True))
    m_sc[...] = m_new

    @pl.when(j == pl.num_programs(1) - 1)
    def _():
        lse = m_sc[...] + jnp.log(l_sc[...])
        num_v_tiles = logits_sc.shape[0]
        for t in range(num_v_tiles):  # static unroll, epilogue only
            o_ref[:, t * tn:(t + 1) * tn] = (
                logits_sc[t] - lse).astype(o_ref.dtype)


# ----------------------------------------------------------------------------
# Two-pass fallback (vocab too large for a resident row panel).
# ----------------------------------------------------------------------------
def _logits_lse_kernel(x_ref, w_ref, b_ref, logits_ref, lse_ref, m_sc, l_sc,
                       *, vocab, tn, needs_mask):
    j = pl.program_id(1)

    @pl.when(j == 0)
    def _():
        m_sc[...] = jnp.full_like(m_sc, -jnp.inf)
        l_sc[...] = jnp.zeros_like(l_sc)

    logits = lax.dot_general(
        x_ref[...], w_ref[...],
        dimension_numbers=(((1,), (1,)), ((), ())),
        preferred_element_type=jnp.float32,
    ) + b_ref[...].astype(jnp.float32)
    logits_ref[...] = logits.astype(logits_ref.dtype)

    if needs_mask:
        col = j * tn + lax.broadcasted_iota(jnp.int32, (1, tn), 1)
        stats = jnp.where(col < vocab, logits, -jnp.inf)
    else:
        stats = logits

    m_prev = m_sc[...]
    m_new = jnp.maximum(m_prev, jnp.max(stats, axis=-1, keepdims=True))
    l_sc[...] = (l_sc[...] * jnp.exp(m_prev - m_new)
                 + jnp.sum(jnp.exp(stats - m_new), axis=-1, keepdims=True))
    m_sc[...] = m_new

    @pl.when(j == pl.num_programs(1) - 1)
    def _():
        lse_ref[...] = m_sc[...] + jnp.log(l_sc[...])


def _normalize_kernel(logits_ref, lse_ref, o_ref):
    o_ref[...] = (logits_ref[...].astype(jnp.float32)
                  - lse_ref[...]).astype(o_ref.dtype)


# ----------------------------------------------------------------------------
# Wrapper
# ----------------------------------------------------------------------------
def projection_layer(x, weight, bias, *, weights_in_bf16=False):
    """log_softmax(x @ weight.T + bias, axis=-1).

    x: (B, S, d_model); weight: (vocab, d_model); bias: (vocab,).
    """
    B, S, d_model = x.shape
    vocab = weight.shape[0]
    N = B * S
    out_dtype = x.dtype

    if weights_in_bf16:
        # Halves weight DMA traffic and uses the native bf16 MXU path; the
        # matmul still accumulates in f32 via preferred_element_type.
        weight = weight.astype(jnp.bfloat16)
        x = x.astype(jnp.bfloat16)

    x_itemsize = jnp.dtype(x.dtype).itemsize
    w_itemsize = jnp.dtype(weight.dtype).itemsize
    out_itemsize = jnp.dtype(out_dtype).itemsize
    inter_dtype = jnp.float32 if out_itemsize >= 4 else jnp.bfloat16
    inter_itemsize = jnp.dtype(inter_dtype).itemsize

    cap = _vmem_cap_bytes()
    # Sub-32-bit activations need a 16-sublane minimum row tile.
    row_min = 8 if x_itemsize >= 4 else 16

    # ---- vocab tile: multiple of 128; keep the double-buffered weight tile
    # within ~1/4 of the VMEM budget; prefer tn dividing vocab exactly so no
    # vocab padding and no post-kernel slice is needed.
    max_tn = (cap // 4) // (2 * d_model * w_itemsize)
    max_tn = max(128, min(2048, (max_tn // 128) * 128))
    if vocab % 128 == 0 and vocab <= max_tn:
        tn = vocab
    else:
        tn = 0
        if vocab % 128 == 0:
            for cand in range(max_tn, 127, -128):
                if vocab % cand == 0:
                    tn = cand
                    break
        if tn == 0:
            tn = min(max_tn, 512)
    v_pad = _round_up(vocab, tn)
    v_tiles = v_pad // tn

    # ---- VMEM working-set estimates (lane/sublane padding accounted for).
    def fused_vmem(tm_):
        return (tm_ * v_pad * 4                      # f32 logits panel (scratch)
                + 2 * tm_ * v_pad * out_itemsize     # output block (dbl-buffered)
                + 2 * tm_ * d_model * x_itemsize     # x tile
                + 2 * tn * d_model * w_itemsize      # weight tile
                + 2 * 8 * tn * 4                     # bias tile (sublane-padded)
                + 2 * tm_ * 128 * 4)                 # m / l scratch (lane-padded)

    def pass1_vmem(tm_):
        return (2 * tm_ * d_model * x_itemsize
                + 2 * tn * d_model * w_itemsize
                + 2 * 8 * tn * 4
                + 2 * tm_ * tn * inter_itemsize
                + 4 * tm_ * 128 * 4)                 # lse out + m/l scratch

    # ---- row tile: prefer large tm (weight is re-streamed once per row tile).
    tm = None
    for cand in (512, 256, 128, 64, 32, 16, 8):
        if cand >= row_min and fused_vmem(cand) <= cap:
            tm = cand
            break
    n_ceil = _round_up(max(N, 1), row_min)
    fused = tm is not None and (tm >= 64 or tm >= n_ceil)

    if not fused:
        tm = row_min
        for cand in (512, 256, 128, 64, 32, 16, 8):
            if cand >= row_min and pass1_vmem(cand) <= cap:
                tm = cand
                break

    # Clamp to the (padded) row count; keep >= 2 row tiles when possible so
    # the "parallel" row axis can shard across both TensorCores on v7x.
    tm = min(tm, n_ceil)
    if _round_up(N, tm) // tm < 2:
        half = _round_up((N + 1) // 2, row_min)
        if row_min <= half < tm:
            tm = half
    n_pad = _round_up(N, tm)

    # ---- pad inputs only when unavoidable.
    x2 = x.reshape(N, d_model)
    if n_pad != N:
        x2 = jnp.pad(x2, ((0, n_pad - N), (0, 0)))
    w, b = weight, bias
    if v_pad != vocab:
        w = jnp.pad(w, ((0, v_pad - vocab), (0, 0)))
        b = jnp.pad(b, ((0, v_pad - vocab),))
    b2 = b.reshape(1, v_pad)

    grid = (n_pad // tm, v_pad // tn)

    if fused:
        kernel = functools.partial(_fused_proj_logsoftmax_kernel,
                                   vocab=vocab, tn=tn,
                                   needs_mask=(v_pad != vocab))
        vmem_limit = min(cap, max(32 << 20,
                                  int(fused_vmem(tm) * 1.5) + (8 << 20)))
        out = pl.pallas_call(
            kernel,
            out_shape=jax.ShapeDtypeStruct((n_pad, v_pad), out_dtype),
            grid_spec=pltpu.PrefetchScalarGridSpec(
                num_scalar_prefetch=0,
                grid=grid,
                in_specs=[
                    pl.BlockSpec((tm, d_model), lambda i, j: (i, 0)),   # x rows
                    pl.BlockSpec((tn, d_model), lambda i, j: (j, 0)),   # W tile
                    pl.BlockSpec((1, tn), lambda i, j: (0, j)),         # bias
                ],
                out_specs=pl.BlockSpec((tm, v_pad), lambda i, j: (i, 0)),
                scratch_shapes=[
                    pltpu.VMEM((v_tiles, tm, tn), jnp.float32),  # logits panel
                    pltpu.VMEM((tm, 1), jnp.float32),            # running max
                    pltpu.VMEM((tm, 1), jnp.float32),            # running sumexp
                ],
            ),
            compiler_params=pltpu.CompilerParams(
                dimension_semantics=("parallel", "arbitrary"),
                vmem_limit_bytes=vmem_limit,
            ),
        )(x2, w, b2)
    else:
        # ---- pass 1: logits (bf16 when output is sub-32-bit) + per-row LSE.
        kernel1 = functools.partial(_logits_lse_kernel, vocab=vocab, tn=tn,
                                    needs_mask=(v_pad != vocab))
        vmem_limit1 = min(cap, max(32 << 20,
                                   int(pass1_vmem(tm) * 1.5) + (8 << 20)))
        logits, lse = pl.pallas_call(
            kernel1,
            out_shape=(jax.ShapeDtypeStruct((n_pad, v_pad), inter_dtype),
                       jax.ShapeDtypeStruct((n_pad, 1), jnp.float32)),
            grid_spec=pltpu.PrefetchScalarGridSpec(
                num_scalar_prefetch=0,
                grid=grid,
                in_specs=[
                    pl.BlockSpec((tm, d_model), lambda i, j: (i, 0)),
                    pl.BlockSpec((tn, d_model), lambda i, j: (j, 0)),
                    pl.BlockSpec((1, tn), lambda i, j: (0, j)),
                ],
                out_specs=[
                    pl.BlockSpec((tm, tn), lambda i, j: (i, j)),
                    pl.BlockSpec((tm, 1), lambda i, j: (i, 0)),
                ],
                scratch_shapes=[pltpu.VMEM((tm, 1), jnp.float32),
                                pltpu.VMEM((tm, 1), jnp.float32)],
            ),
            compiler_params=pltpu.CompilerParams(
                dimension_semantics=("parallel", "arbitrary"),
                vmem_limit_bytes=vmem_limit1,
            ),
        )(x2, w, b2)

        # ---- pass 2: pure HBM bandwidth; use the largest lane-dense block.
        tn2 = tn
        if (2 * tm * v_pad * (inter_itemsize + out_itemsize)
                + 2 * tm * 128 * 4) <= cap:
            tn2 = v_pad
        grid2 = (n_pad // tm, v_pad // tn2)
        vmem_limit2 = min(cap, max(
            32 << 20,
            int((2 * tm * tn2 * (inter_itemsize + out_itemsize)
                 + 2 * tm * 128 * 4) * 1.5) + (8 << 20)))
        out = pl.pallas_call(
            _normalize_kernel,
            out_shape=jax.ShapeDtypeStruct((n_pad, v_pad), out_dtype),
            grid_spec=pltpu.PrefetchScalarGridSpec(
                num_scalar_prefetch=0,
                grid=grid2,
                in_specs=[
                    pl.BlockSpec((tm, tn2), lambda i, j: (i, j)),
                    pl.BlockSpec((tm, 1), lambda i, j: (i, 0)),
                ],
                out_specs=pl.BlockSpec((tm, tn2), lambda i, j: (i, j)),
            ),
            compiler_params=pltpu.CompilerParams(
                dimension_semantics=("parallel", "parallel"),
                vmem_limit_bytes=vmem_limit2,
            ),
        )(logits, lse)

    if n_pad != N or v_pad != vocab:
        out = out[:N, :vocab]
    return out.reshape(B, S, vocab)


def _reference(x, weight, bias):
    logits = jnp.einsum("bsd,vd->bsv", x, weight) + bias
    return jax.nn.log_softmax(logits, axis=-1)


if __name__ == "__main__":
    # Small shapes: N=14 exercises row padding + the 2-row-tile split; vocab=640
    # is a multiple of 128 that becomes a single resident vocab tile (fused path).
    batch, seq, d_model, vocab = 2, 7, 32, 640

    key = jax.random.PRNGKey(0)
    kx, kw, kb = jax.random.split(key, 3)

    x = jax.random.normal(kx, (batch, seq, d_model), dtype=jnp.float32)
    # deterministic init mimicking nn.Linear's uniform(-1/sqrt(d), 1/sqrt(d))
    bound = 1.0 / jnp.sqrt(jnp.float32(d_model))
    weight = jax.random.uniform(
        kw, (vocab, d_model), minval=-bound, maxval=bound, dtype=jnp.float32)
    bias = jax.random.uniform(
        kb, (vocab,), minval=-bound, maxval=bound, dtype=jnp.float32)

    out = projection_layer(x, weight, bias)
    jax.block_until_ready(out)

    ref = _reference(x, weight, bias)
    assert out.shape == (batch, seq, vocab)
    assert jnp.allclose(out, ref, atol=1e-5, rtol=1e-5), float(
        jnp.max(jnp.abs(out - ref)))

    print("KERNEL_OK")
</pallas_src>

<mosaic_0001>
module attributes {stable_mosaic.version = 11 : i64} {
  func.func @_fused_proj_logsoftmax_kernel(%arg0: i32, %arg1: i32, %arg2: memref<8x32xf32, #tpu.memory_space<vmem>>, %arg3: memref<640x32xf32, #tpu.memory_space<vmem>>, %arg4: memref<1x640xf32, #tpu.memory_space<vmem>>, %arg5: memref<8x640xf32, #tpu.memory_space<vmem>>, %arg6: memref<1x8x640xf32, #tpu.memory_space<vmem>>, %arg7: memref<8x1xf32, #tpu.memory_space<vmem>>, %arg8: memref<8x1xf32, #tpu.memory_space<vmem>>) attributes {dimension_semantics = [#tpu.dimension_semantics<parallel>, #tpu.dimension_semantics<arbitrary>], iteration_bounds = array<i64: 2, 1>, scalar_prefetch = 0 : i64, scratch_operands = 3 : i64, tpu.core_type = #tpu.core_type<tc>, window_params = [{transform_indices = @transform_0, window_bounds = array<i64: 8, 32>}, {transform_indices = @transform_1, window_bounds = array<i64: 640, 32>}, {transform_indices = @transform_2, window_bounds = array<i64: 1, 640>}, {transform_indices = @transform_3, window_bounds = array<i64: 8, 640>}]} {
    %c0_i32 = arith.constant 0 : i32
    %0 = arith.cmpi eq, %arg1, %c0_i32 : i32
    %1 = arith.extui %0 : i1 to i32
    %c0_i32_0 = arith.constant 0 : i32
    %2 = arith.cmpi ne, %1, %c0_i32_0 : i32
    scf.if %2 {
      %cst_20 = arith.constant 0xFF800000 : f32
      %32 = vector.broadcast %cst_20 : f32 to vector<8x1xf32>
      %c0_21 = arith.constant 0 : index
      %c0_22 = arith.constant 0 : index
      %33 = vector.load %arg7[%c0_21, %c0_22] : memref<8x1xf32, #tpu.memory_space<vmem>>, vector<8x1xf32>
      tpu.vector_store %arg7[%c0_21, %c0_22], %32 {strides = array<i32>} : memref<8x1xf32, #tpu.memory_space<vmem>>, vector<8x1xf32>,
      %cst_23 = arith.constant 0.000000e+00 : f32
      %34 = vector.broadcast %cst_23 : f32 to vector<8x1xf32>
      %c0_24 = arith.constant 0 : index
      %c0_25 = arith.constant 0 : index
      %35 = vector.load %arg8[%c0_24, %c0_25] : memref<8x1xf32, #tpu.memory_space<vmem>>, vector<8x1xf32>
      tpu.vector_store %arg8[%c0_24, %c0_25], %34 {strides = array<i32>} : memref<8x1xf32, #tpu.memory_space<vmem>>, vector<8x1xf32>,
    } else {
    }
    %c0 = arith.constant 0 : index
    %c0_1 = arith.constant 0 : index
    %3 = vector.load %arg2[%c0, %c0_1] : memref<8x32xf32, #tpu.memory_space<vmem>>, vector<8x32xf32>
    %c0_2 = arith.constant 0 : index
    %c0_3 = arith.constant 0 : index
    %4 = vector.load %arg3[%c0_2, %c0_3] : memref<640x32xf32, #tpu.memory_space<vmem>>, vector<640x32xf32>
    %cst = arith.constant dense<0.000000e+00> : vector<8x640xf32>
    %5 = tpu.matmul %3, %4, %cst {dimension_numbers = #tpu.dot_dimension_numbers<[1], [1], [0], [0], [0, 0, 1, 0], [], []>} : vector<8x32xf32>, vector<640x32xf32>, vector<8x640xf32> -> vector<8x640xf32>
    %c0_4 = arith.constant 0 : index
    %c0_5 = arith.constant 0 : index
    %6 = vector.load %arg4[%c0_4, %c0_5] : memref<1x640xf32, #tpu.memory_space<vmem>>, vector<1x640xf32>
    %7 = vector.broadcast %6 : vector<1x640xf32> to vector<8x640xf32>
    %8 = arith.addf %5, %7 : vector<8x640xf32>
    %9 = arith.index_cast %arg1 : i32 to index
    %c0_6 = arith.constant 0 : index
    %c0_7 = arith.constant 0 : index
    %10 = vector.load %arg6[%9, %c0_6, %c0_7] : memref<1x8x640xf32, #tpu.memory_space<vmem>>, vector<1x8x640xf32>
    %11 = vector.shape_cast %10 : vector<1x8x640xf32> to vector<8x640xf32>
    %12 = vector.shape_cast %8 : vector<8x640xf32> to vector<1x8x640xf32>
    tpu.vector_store %arg6[%9, %c0_6, %c0_7], %12 {strides = array<i32>} : memref<1x8x640xf32, #tpu.memory_space<vmem>>, vector<1x8x640xf32>,
    %c0_8 = arith.constant 0 : index
    %c0_9 = arith.constant 0 : index
    %13 = vector.load %arg7[%c0_8, %c0_9] : memref<8x1xf32, #tpu.memory_space<vmem>>, vector<8x1xf32>
    %cst_10 = arith.constant dense<0xFF800000> : vector<8xf32>
    %14 = vector.multi_reduction <maximumf>, %8, %cst_10 [1] : vector<8x640xf32> to vector<8xf32>
    %15 = vector.shape_cast %14 : vector<8xf32> to vector<8x1xf32>
    %16 = arith.maximumf %13, %15 : vector<8x1xf32>
    %c0_11 = arith.constant 0 : index
    %c0_12 = arith.constant 0 : index
    %17 = vector.load %arg8[%c0_11, %c0_12] : memref<8x1xf32, #tpu.memory_space<vmem>>, vector<8x1xf32>
    %18 = arith.subf %13, %16 : vector<8x1xf32>
    %19 = math.exp %18 : vector<8x1xf32>
    %20 = arith.mulf %17, %19 : vector<8x1xf32>
    %21 = vector.broadcast %16 : vector<8x1xf32> to vector<8x640xf32>
    %22 = arith.subf %8, %21 : vector<8x640xf32>
    %23 = math.exp %22 : vector<8x640xf32>
    %cst_13 = arith.constant dense<0.000000e+00> : vector<8xf32>
    %24 = vector.multi_reduction <add>, %23, %cst_13 [1] : vector<8x640xf32> to vector<8xf32>
    %25 = vector.shape_cast %24 : vector<8xf32> to vector<8x1xf32>
    %26 = arith.addf %20, %25 : vector<8x1xf32>
    %c0_14 = arith.constant 0 : index
    %c0_15 = arith.constant 0 : index
    %27 = vector.load %arg8[%c0_14, %c0_15] : memref<8x1xf32, #tpu.memory_space<vmem>>, vector<8x1xf32>
    tpu.vector_store %arg8[%c0_14, %c0_15], %26 {strides = array<i32>} : memref<8x1xf32, #tpu.memory_space<vmem>>, vector<8x1xf32>,
    %c0_16 = arith.constant 0 : index
    %c0_17 = arith.constant 0 : index
    %28 = vector.load %arg7[%c0_16, %c0_17] : memref<8x1xf32, #tpu.memory_space<vmem>>, vector<8x1xf32>
    tpu.vector_store %arg7[%c0_16, %c0_17], %16 {strides = array<i32>} : memref<8x1xf32, #tpu.memory_space<vmem>>, vector<8x1xf32>,
    %c0_i32_18 = arith.constant 0 : i32
    %29 = arith.cmpi eq, %arg1, %c0_i32_18 : i32
    %30 = arith.extui %29 : i1 to i32
    %c0_i32_19 = arith.constant 0 : i32
    %31 = arith.cmpi ne, %30, %c0_i32_19 : i32
    scf.if %31 {
      %c0_20 = arith.constant 0 : index
      %c0_21 = arith.constant 0 : index
      %32 = vector.load %arg7[%c0_20, %c0_21] : memref<8x1xf32, #tpu.memory_space<vmem>>, vector<8x1xf32>
      %c0_22 = arith.constant 0 : index
      %c0_23 = arith.constant 0 : index
      %33 = vector.load %arg8[%c0_22, %c0_23] : memref<8x1xf32, #tpu.memory_space<vmem>>, vector<8x1xf32>
      %34 = math.log %33 : vector<8x1xf32>
      %35 = arith.addf %32, %34 : vector<8x1xf32>
      %c0_24 = arith.constant 0 : index
      %c0_25 = arith.constant 0 : index
      %c0_26 = arith.constant 0 : index
      %36 = vector.load %arg6[%c0_24, %c0_25, %c0_26] : memref<1x8x640xf32, #tpu.memory_space<vmem>>, vector<1x8x640xf32>
      %37 = vector.shape_cast %36 : vector<1x8x640xf32> to vector<8x640xf32>
      %38 = vector.broadcast %35 : vector<8x1xf32> to vector<8x640xf32>
      %39 = arith.subf %37, %38 : vector<8x640xf32>
      %c0_27 = arith.constant 0 : index
      %c0_28 = arith.constant 0 : index
      %40 = vector.load %arg5[%c0_27, %c0_28] : memref<8x640xf32, #tpu.memory_space<vmem>>, vector<8x640xf32>
      tpu.vector_store %arg5[%c0_27, %c0_28], %39 {strides = array<i32>} : memref<8x640xf32, #tpu.memory_space<vmem>>, vector<8x640xf32>,
    } else {
    }
    return
  }
  func.func @transform_0(%arg0: i32, %arg1: i32) -> (i32, i32) {
    %c0_i32 = arith.constant 0 : i32
    %c0_i32_0 = arith.constant 0 : i32
    return %arg0, %c0_i32 : i32, i32
  }
  func.func @transform_1(%arg0: i32, %arg1: i32) -> (i32, i32) {
    %c0_i32 = arith.constant 0 : i32
    %c0_i32_0 = arith.constant 0 : i32
    return %arg1, %c0_i32 : i32, i32
  }
  func.func @transform_2(%arg0: i32, %arg1: i32) -> (i32, i32) {
    %c0_i32 = arith.constant 0 : i32
    %c0_i32_0 = arith.constant 0 : i32
    return %c0_i32, %arg1 : i32, i32
  }
  func.func @transform_3(%arg0: i32, %arg1: i32) -> (i32, i32) {
    %c0_i32 = arith.constant 0 : i32
    %c0_i32_0 = arith.constant 0 : i32
    return %arg0, %c0_i32 : i32, i32
  }
}

</mosaic_0001>

<llo_original>
// kernel: tpu_custom_call.1
$region0: #{tpu_custom_call.1}
  #allocation0 [shape = 'u32[]', space=smem, size = 0x4, offset = 0x4, fixed_abs, tag = 'smem constant byte address 0x4 - core index']
  #allocation1 [shape = 'u32[144,128]{1,0:T(1,128)}', space=vmem, size = 0x12000, scoped, tag = 'internal scratch']
  #allocation2 [shape = 'f32[1,8,640]{2,1,0:T(8,128)}', space=vmem, size = 0x5000, scoped, tag = 'scratch operand']
  #allocation3 [shape = 'f32[8,1]{1,0:T(8,128)}', space=vmem, size = 0x1000, scoped, tag = 'scratch operand']
  #allocation4 [shape = 'f32[8,1]{1,0:T(8,128)}', space=vmem, size = 0x1000, scoped, tag = 'scratch operand']
  %s0 = inlined_call_operand.vmem [shape: f32[16,32], index: 0, kind: input, shape index: {}]
  %s1 = inlined_call_operand.vmem [shape: f32[640,32], index: 1, kind: input, shape index: {}]
  %s2 = inlined_call_operand.vmem [shape: f32[1,640], index: 2, kind: input, shape index: {}]
  %s3 = inlined_call_operand.hbm [shape: f32[16,640], index: 3, kind: output, shape index: {}]
  %s4 = sld [smem:[#allocation0]]
  $region53: #{tpu_custom_call.1} parent=0
    _
  %s6 = ssub.s32 1, %s4
  %s7 = scalar_select 0, %s6, %s4
  $region1: #{tpu_custom_call.1} parent=0
    #allocation5 [shape = 'u8[40960]{0}', space=vmem, size = 0xa000, scoped, tag = 'output window, operand 0']
    #allocation6 [shape = 's32[2]{0}', space=sflag, size = 0x8, scoped, tag = 'scoped memory for tpu_custom_call.1']
    %8 = vsyncpa [#allocation6], 0
    %s9 = scalar_lea.sflag [#allocation6], 1
    %10 = vsyncpa %s9, 0
    loop: start=0, step=1, limit=4
    $region2: #{tpu_custom_call.1} parent=1 // loop_pre_header
      _
    $region3: #{tpu_custom_call.1} parent=1 // loop_header
      %s12 = sphi 0, %s16
      %p13 = scmp.ge.s32.totalorder %s12, 4
      %s19 = sphi 0, %s31
      %s20 = sphi 0, %s27
      %s21 = sphi 0, %s19
      %s22 = sphi 0, %s20
      %s23 = sphi 0, %s21
      %s24 = sphi 0, %s22
      %s34 = sphi 0, %s36
      %s37 = sphi 0, %s34
      %s38 = sphi 0, %s37
      %s54 = sphi 0, %s38
      %s60 = sphi 0, %s62
      %s63 = sphi 0, %s60
      %s64 = sphi 0, %s63
      %s80 = sphi 0, %s64
      %s86 = sphi 0, %s88
      %s89 = sphi 0, %s86
      %s90 = sphi 0, %s89
      %s106 = sphi 0, %s90
      %s112 = sphi 0, %s114
      %s115 = sphi 0, %s112
      %s116 = sphi 0, %s115
      %s132 = sphi 0, %s116
    $region4: #{tpu_custom_call.1} parent=1 // loop_header_branch
      %15 = sbr.rel (%p13) target = $region8
    $region5: #{tpu_custom_call.1} parent=1 // loop_body
      %s17 = ssub.s32 %s12, 1
      %s18 = ssub.s32 %s12, 2
      %s25 = sadd.s32 1, %s20
      %p26 = scmp.ge.s32.totalorder %s25, 1
      %s27 = scalar_select %p26, 0, %s25
      %s28 = sadd.s32 1, %s19
      %s29 = scalar_select %p26, %s28, %s19
      %p30 = scmp.ge.s32.totalorder %s29, 2
      %s31 = scalar_select %p30, 0, %s29
      %s32 = ssub.s32 %s19, %s31
      %p33 = scmp.eq.s32.totalorder %s32, 0
      %s35 = sadd.s32 %s34, 1
      %s36 = scalar_select %p33, %s34, %s35
      %p39 = pneg %p33
      %p40 = scmp.eq.s32.totalorder %s12, 1
      %p41 = por %p39, %p40
      %p42 = scmp.ne.s32.totalorder %s34, %s37
      %p43 = scmp.eq.s32.totalorder %s12, 0
      %p44 = por %p42, %p43
      %p45 = scmp.ne.s32.totalorder %s34, %s37
      %p46 = scmp.eq.s32.totalorder %s17, 1
      %p47 = por %p45, %p46
      %p48 = scmp.ne.s32.totalorder %s37, %s38
      %p49 = scmp.eq.s32.totalorder %s17, 0
      %p50 = por %p48, %p49
      %p51 = scmp.ne.s32.totalorder %s37, %s38
      %p52 = scmp.eq.s32.totalorder %s18, 1
      %p53 = por %p51, %p52
      %p55 = scmp.ne.s32.totalorder %s38, %s54
      %p56 = scmp.eq.s32.totalorder %s18, 0
      %p57 = por %p55, %p56
      %s58 = ssub.s32 %s20, %s27
      %p59 = scmp.eq.s32.totalorder %s58, 0
      %s61 = sadd.s32 %s60, 1
      %s62 = scalar_select %p59, %s60, %s61
      %p65 = pneg %p59
      %p66 = scmp.eq.s32.totalorder %s12, 1
      %p67 = por %p65, %p66
      %p68 = scmp.ne.s32.totalorder %s60, %s63
      %p69 = scmp.eq.s32.totalorder %s12, 0
      %p70 = por %p68, %p69
      %p71 = scmp.ne.s32.totalorder %s60, %s63
      %p72 = scmp.eq.s32.totalorder %s17, 1
      %p73 = por %p71, %p72
      %p74 = scmp.ne.s32.totalorder %s63, %s64
      %p75 = scmp.eq.s32.totalorder %s17, 0
      %p76 = por %p74, %p75
      %p77 = scmp.ne.s32.totalorder %s63, %s64
      %p78 = scmp.eq.s32.totalorder %s18, 1
      %p79 = por %p77, %p78
      %p81 = scmp.ne.s32.totalorder %s64, %s80
      %p82 = scmp.eq.s32.totalorder %s18, 0
      %p83 = por %p81, %p82
      %s84 = ssub.s32 %s20, %s27
      %p85 = scmp.eq.s32.totalorder %s84, 0
      %s87 = sadd.s32 %s86, 1
      %s88 = scalar_select %p85, %s86, %s87
      %p91 = pneg %p85
      %p92 = scmp.eq.s32.totalorder %s12, 1
      %p93 = por %p91, %p92
      %p94 = scmp.ne.s32.totalorder %s86, %s89
      %p95 = scmp.eq.s32.totalorder %s12, 0
      %p96 = por %p94, %p95
      %p97 = scmp.ne.s32.totalorder %s86, %s89
      %p98 = scmp.eq.s32.totalorder %s17, 1
      %p99 = por %p97, %p98
      %p100 = scmp.ne.s32.totalorder %s89, %s90
      %p101 = scmp.eq.s32.totalorder %s17, 0
      %p102 = por %p100, %p101
      %p103 = scmp.ne.s32.totalorder %s89, %s90
      %p104 = scmp.eq.s32.totalorder %s18, 1
      %p105 = por %p103, %p104
      %p107 = scmp.ne.s32.totalorder %s90, %s106
      %p108 = scmp.eq.s32.totalorder %s18, 0
      %p109 = por %p107, %p108
      %s110 = ssub.s32 %s19, %s31
      %p111 = scmp.eq.s32.totalorder %s110, 0
      %s113 = sadd.s32 %s112, 1
      %s114 = scalar_select %p111, %s112, %s113
      %p117 = pneg %p111
      %p118 = scmp.eq.s32.totalorder %s12, 1
      %p119 = por %p117, %p118
      %p120 = scmp.ne.s32.totalorder %s112, %s115
      %p121 = scmp.eq.s32.totalorder %s12, 0
      %p122 = por %p120, %p121
      %p123 = scmp.ne.s32.totalorder %s112, %s115
      %p124 = scmp.eq.s32.totalorder %s17, 1
      %p125 = por %p123, %p124
      %p126 = scmp.ne.s32.totalorder %s115, %s116
      %p127 = scmp.eq.s32.totalorder %s17, 0
      %p128 = por %p126, %p127
      %p129 = scmp.ne.s32.totalorder %s115, %s116
      %p130 = scmp.eq.s32.totalorder %s18, 1
      %p131 = por %p129, %p130
      %p133 = scmp.ne.s32.totalorder %s116, %s132
      %p134 = scmp.eq.s32.totalorder %s18, 0
      %p135 = por %p133, %p134
      %p136 = scmp.le.s32.totalorder 1, %s12
      %p137 = scmp.lt.s32.totalorder %s12, 3
      %p138 = pnand %p136, %p137
      %p139 = pneg %p138
      // Predicated region
      $region9: #{tpu_custom_call.1} parent=5 // pred_check
        _
      $region10: #{tpu_custom_call.1} parent=5 // pred_check_branch
        %141 = sbr.rel (%p138) target = $region12
      $region11: #{tpu_custom_call.1} parent=5 // pred_region
        %s142 = ssub.s32 %s12, 1
        // Predicated region
        $region13: #{tpu_custom_call.1} parent=11 // pred_check
          %p143 = pneg %p76
        $region14: #{tpu_custom_call.1} parent=11 // pred_check_branch
          %145 = sbr.rel (%p143) target = $region16
        $region15: #{tpu_custom_call.1} parent=11 // pred_region
          %s146 = smul.u32 80, %s22
          %p147 = scmp.lt.s32.totalorder %s146, 79
          %s148 = scalar_select %p147, %s146, 79
          %s149 = smul.addr %s148, 8
          %s150 = scalar_lea.vmem %s1, %s149
          %s151 = smul.u32 80, %s22
        $region16: #{tpu_custom_call.1} parent=11 // pred_fallthru
          _
        // Predicated region
        $region17: #{tpu_custom_call.1} parent=11 // pred_check
          %p152 = pneg %p102
        $region18: #{tpu_custom_call.1} parent=11 // pred_check_branch
          %154 = sbr.rel (%p152) target = $region20
        $region19: #{tpu_custom_call.1} parent=11 // pred_region
          %s155 = smul.u32 5, %s22
          %p156 = scmp.lt.s32.totalorder %s155, 4
          %s157 = scalar_select %p156, %s155, 4
          %s158 = scalar_lea.vmem %s2, %s157
          %s159 = smul.u32 5, %s22
        $region20: #{tpu_custom_call.1} parent=11 // pred_fallthru
          _
      $region12: #{tpu_custom_call.1} parent=5 // pred_fallthru
        _
      %p160 = scmp.lt.s32.totalorder %s12, 2
      // Predicated region
      $region21: #{tpu_custom_call.1} parent=5 // pred_check
        %p161 = pneg %p160
      $region22: #{tpu_custom_call.1} parent=5 // pred_check_branch
        %163 = sbr.rel (%p161) target = $region24
      $region23: #{tpu_custom_call.1} parent=5 // pred_region
        // Predicated region
        $region25: #{tpu_custom_call.1} parent=23 // pred_check
          %p164 = pneg %p44
        $region26: #{tpu_custom_call.1} parent=23 // pred_check_branch
          %166 = sbr.rel (%p164) target = $region28
        $region27: #{tpu_custom_call.1} parent=23 // pred_region
          %p167 = scmp.lt.s32.totalorder %s19, 1
          %s168 = scalar_select %p167, %s19, 1
          %s169 = smul.addr %s168, 8
          %s170 = scalar_lea.vmem %s0, %s169
        $region28: #{tpu_custom_call.1} parent=23 // pred_fallthru
          _
      $region24: #{tpu_custom_call.1} parent=5 // pred_fallthru
        _
      %p171 = scmp.le.s32.totalorder 1, %s12
      %p172 = scmp.lt.s32.totalorder %s12, 3
      %p173 = pnand %p171, %p172
      %p174 = pneg %p173
      // Predicated region
      $region29: #{tpu_custom_call.1} parent=5 // pred_check
        _
      $region30: #{tpu_custom_call.1} parent=5 // pred_check_branch
        %176 = sbr.rel (%p173) target = $region32
      $region31: #{tpu_custom_call.1} parent=5 // pred_region
        %s177 = ssub.s32 %s12, 1
        %p178 = scmp.lt.s32.totalorder %s21, 1
        %s179 = scalar_select %p178, %s21, 1
        %s180 = smul.addr %s179, 8
        %s181 = scalar_lea.vmem %s0, %s180
        %p182 = pneg %p50
        %p183 = pneg %p47
        %s184 = smul.u32 80, %s22
        %p185 = scmp.lt.s32.totalorder %s184, 79
        %s186 = scalar_select %p185, %s184, 79
        %s187 = smul.addr %s186, 8
        %s188 = scalar_lea.vmem %s1, %s187
        %p189 = pneg %p76
        %p190 = pneg %p73
        %s191 = smul.u32 5, %s22
        %p192 = scmp.lt.s32.totalorder %s191, 4
        %s193 = scalar_select %p192, %s191, 4
        %s194 = scalar_lea.vmem %s2, %s193
        %p195 = pneg %p102
        %p196 = pneg %p99
        %p197 = pneg %p128
        %p198 = pneg %p125
        %s199 = sand.u32 %s115, 1
        %s200 = scalar_lea.sflag [#allocation6], %s199
        %s201 = sand.u32 %s115, 1
        %s202 = smul.addr %s201, 40
        %s203 = scalar_lea.vmem [#allocation5], %s202
        %p204 = scmp.lt.s32.totalorder %s21, 1
        %s205 = scalar_select %p204, %s21, 1
        %s206 = smul.addr %s205, 8
        %s207 = scalar_lea.vmem %s0, %s206
        %s208 = smul.u32 80, %s22
        %p209 = scmp.lt.s32.totalorder %s208, 79
        %s210 = scalar_select %p209, %s208, 79
        %s211 = smul.addr %s210, 8
        %s212 = scalar_lea.vmem %s1, %s211
        %s213 = smul.u32 80, %s22
        %s214 = smul.u32 5, %s22
        %p215 = scmp.lt.s32.totalorder %s214, 4
        %s216 = scalar_select %p215, %s214, 4
        %s217 = scalar_lea.vmem %s2, %s216
        %s218 = smul.u32 5, %s22
        %p219 = scmp.eq.s32.totalorder %s22, 0
        // Predicated region
        $region33: #{tpu_custom_call.1} parent=31 // pred_check
          %p220 = pneg %p219
        $region34: #{tpu_custom_call.1} parent=31 // pred_check_branch
          %222 = sbr.rel (%p220) target = $region36
        $region35: #{tpu_custom_call.1} parent=31 // pred_region
          %vm223 = vcmask 7168
          %224 = vst.msk [vmem:[#allocation3] sm:$0xff] %vm223, -inf
          %225 = vst.msk [vmem:[#allocation4] sm:$0xff] %vm223, 0.0
        $region36: #{tpu_custom_call.1} parent=31 // pred_fallthru
          _
        %v226 = vld [vmem:[%s207] sm:$0xff]
        %v227 = vld [vmem:[%s212] sm:$0xff]
        %v228 = vld [vmem:[%s212 + $0x8] sm:$0xff]
        %v229 = vld [vmem:[%s212 + $0x10] sm:$0xff]
        %v230 = vld [vmem:[%s212 + $0x18] sm:$0xff]
        %v231 = vld [vmem:[%s212 + $0x20] sm:$0xff]
        %v232 = vld [vmem:[%s212 + $0x28] sm:$0xff]
        %v233 = vld [vmem:[%s212 + $0x30] sm:$0xff]
        %v234 = vld [vmem:[%s212 + $0x38] sm:$0xff]
        %v235 = vld [vmem:[%s212 + $0x40] sm:$0xff]
        %v236 = vld [vmem:[%s212 + $0x48] sm:$0xff]
        %v237 = vld [vmem:[%s212 + $0x50] sm:$0xff]
        %v238 = vld [vmem:[%s212 + $0x58] sm:$0xff]
        %v239 = vld [vmem:[%s212 + $0x60] sm:$0xff]
        %v240 = vld [vmem:[%s212 + $0x68] sm:$0xff]
        %v241 = vld [vmem:[%s212 + $0x70] sm:$0xff]
        %v242 = vld [vmem:[%s212 + $0x78] sm:$0xff]
        %v243 = vld [vmem:[%s212 + $0x80] sm:$0xff]
        %v244 = vld [vmem:[%s212 + $0x88] sm:$0xff]
        %v245 = vld [vmem:[%s212 + $0x90] sm:$0xff]
        %v246 = vld [vmem:[%s212 + $0x98] sm:$0xff]
        %v247 = vld [vmem:[%s212 + $0xa0] sm:$0xff]
        %v248 = vld [vmem:[%s212 + $0xa8] sm:$0xff]
        %v249 = vld [vmem:[%s212 + $0xb0] sm:$0xff]
        %v250 = vld [vmem:[%s212 + $0xb8] sm:$0xff]
        %v251 = vld [vmem:[%s212 + $0xc0] sm:$0xff]
        %v252 = vld [vmem:[%s212 + $0xc8] sm:$0xff]
        %v253 = vld [vmem:[%s212 + $0xd0] sm:$0xff]
        %v254 = vld [vmem:[%s212 + $0xd8] sm:$0xff]
        %v255 = vld [vmem:[%s212 + $0xe0] sm:$0xff]
        %v256 = vld [vmem:[%s212 + $0xe8] sm:$0xff]
        %v257 = vld [vmem:[%s212 + $0xf0] sm:$0xff]
        %v258 = vld [vmem:[%s212 + $0xf8] sm:$0xff]
        %v259 = vld [vmem:[%s212 + $0x100] sm:$0xff]
        %v260 = vld [vmem:[%s212 + $0x108] sm:$0xff]
        %v261 = vld [vmem:[%s212 + $0x110] sm:$0xff]
        %v262 = vld [vmem:[%s212 + $0x118] sm:$0xff]
        %v263 = vld [vmem:[%s212 + $0x120] sm:$0xff]
        %v264 = vld [vmem:[%s212 + $0x128] sm:$0xff]
        %v265 = vld [vmem:[%s212 + $0x130] sm:$0xff]
        %v266 = vld [vmem:[%s212 + $0x138] sm:$0xff]
        %v267 = vld [vmem:[%s212 + $0x140] sm:$0xff]
        %v268 = vld [vmem:[%s212 + $0x148] sm:$0xff]
        %v269 = vld [vmem:[%s212 + $0x150] sm:$0xff]
        %v270 = vld [vmem:[%s212 + $0x158] sm:$0xff]
        %v271 = vld [vmem:[%s212 + $0x160] sm:$0xff]
        %v272 = vld [vmem:[%s212 + $0x168] sm:$0xff]
        %v273 = vld [vmem:[%s212 + $0x170] sm:$0xff]
        %v274 = vld [vmem:[%s212 + $0x178] sm:$0xff]
        %v275 = vld [vmem:[%s212 + $0x180] sm:$0xff]
        %v276 = vld [vmem:[%s212 + $0x188] sm:$0xff]
        %v277 = vld [vmem:[%s212 + $0x190] sm:$0xff]
        %v278 = vld [vmem:[%s212 + $0x198] sm:$0xff]
        %v279 = vld [vmem:[%s212 + $0x1a0] sm:$0xff]
        %v280 = vld [vmem:[%s212 + $0x1a8] sm:$0xff]
        %v281 = vld [vmem:[%s212 + $0x1b0] sm:$0xff]
        %v282 = vld [vmem:[%s212 + $0x1b8] sm:$0xff]
        %v283 = vld [vmem:[%s212 + $0x1c0] sm:$0xff]
        %v284 = vld [vmem:[%s212 + $0x1c8] sm:$0xff]
        %v285 = vld [vmem:[%s212 + $0x1d0] sm:$0xff]
        %v286 = vld [vmem:[%s212 + $0x1d8] sm:$0xff]
        %v287 = vld [vmem:[%s212 + $0x1e0] sm:$0xff]
        %v288 = vld [vmem:[%s212 + $0x1e8] sm:$0xff]
        %v289 = vld [vmem:[%s212 + $0x1f0] sm:$0xff]
        %v290 = vld [vmem:[%s212 + $0x1f8] sm:$0xff]
        %v291 = vld [vmem:[%s212 + $0x200] sm:$0xff]
        %v292 = vld [vmem:[%s212 + $0x208] sm:$0xff]
        %v293 = vld [vmem:[%s212 + $0x210] sm:$0xff]
        %v294 = vld [vmem:[%s212 + $0x218] sm:$0xff]
        %v295 = vld [vmem:[%s212 + $0x220] sm:$0xff]
        %v296 = vld [vmem:[%s212 + $0x228] sm:$0xff]
        %v297 = vld [vmem:[%s212 + $0x230] sm:$0xff]
        %v298 = vld [vmem:[%s212 + $0x238] sm:$0xff]
        %v299 = vld [vmem:[%s212 + $0x240] sm:$0xff]
        %v300 = vld [vmem:[%s212 + $0x248] sm:$0xff]
        %v301 = vld [vmem:[%s212 + $0x250] sm:$0xff]
        %v302 = vld [vmem:[%s212 + $0x258] sm:$0xff]
        %v303 = vld [vmem:[%s212 + $0x260] sm:$0xff]
        %v304 = vld [vmem:[%s212 + $0x268] sm:$0xff]
        %v305 = vld [vmem:[%s212 + $0x270] sm:$0xff]
        %v306 = vld [vmem:[%s212 + $0x278] sm:$0xff]
        %v307 = vld [vmem:[%s217] sm:$0x1f]
        %v309 = vlaneseq
        %v310 = vshrl.u32 %v309, 7
        %v311 = vsub.s32 0, %v310
        %v312 = vrot.slane %v307, %v311
        %v313 = vlaneseq
        %v314 = vshrl.u32 %v313, 7
        %v315 = vsub.s32 1, %v314
        %v316 = vrot.slane %v307, %v315
        %v317 = vlaneseq
        %v318 = vshrl.u32 %v317, 7
        %v319 = vsub.s32 2, %v318
        %v320 = vrot.slane %v307, %v319
        %v321 = vlaneseq
        %v322 = vshrl.u32 %v321, 7
        %v323 = vsub.s32 3, %v322
        %v324 = vrot.slane %v307, %v323
        %v325 = vlaneseq
        %v326 = vshrl.u32 %v325, 7
        %v327 = vsub.s32 4, %v326
        %v328 = vrot.slane %v307, %v327
        %vm334 = vcmask 261120
        %v336 = vsel %vm334, %v226, 0
        %v339 = vsel %vm334, %v227, 0
        %v342 = vsel %vm334, %v228, 0
        %v345 = vsel %vm334, %v229, 0
        %v348 = vsel %vm334, %v230, 0
        %v351 = vsel %vm334, %v231, 0
        %v354 = vsel %vm334, %v232, 0
        %v357 = vsel %vm334, %v233, 0
        %v360 = vsel %vm334, %v234, 0
        %v363 = vsel %vm334, %v235, 0
        %v366 = vsel %vm334, %v236, 0
        %v369 = vsel %vm334, %v237, 0
        %v372 = vsel %vm334, %v238, 0
        %v375 = vsel %vm334, %v239, 0
        %v378 = vsel %vm334, %v240, 0
        %v381 = vsel %vm334, %v241, 0
        %v384 = vsel %vm334, %v242, 0
        %v387 = vsel %vm334, %v243, 0
        %v390 = vsel %vm334, %v244, 0
        %v393 = vsel %vm334, %v245, 0
        %v396 = vsel %vm334, %v246, 0
        %v399 = vsel %vm334, %v247, 0
        %v402 = vsel %vm334, %v248, 0
        %v405 = vsel %vm334, %v249, 0
        %v408 = vsel %vm334, %v250, 0
        %v411 = vsel %vm334, %v251, 0
        %v414 = vsel %vm334, %v252, 0
        %v417 = vsel %vm334, %v253, 0
        %v420 = vsel %vm334, %v254, 0
        %v423 = vsel %vm334, %v255, 0
        %v426 = vsel %vm334, %v256, 0
        %v429 = vsel %vm334, %v257, 0
        %v432 = vsel %vm334, %v258, 0
        %v435 = vsel %vm334, %v259, 0
        %v438 = vsel %vm334, %v260, 0
        %v441 = vsel %vm334, %v261, 0
        %v444 = vsel %vm334, %v262, 0
        %v447 = vsel %vm334, %v263, 0
        %v450 = vsel %vm334, %v264, 0
        %v453 = vsel %vm334, %v265, 0
        %v456 = vsel %vm334, %v266, 0
        %v459 = vsel %vm334, %v267, 0
        %v462 = vsel %vm334, %v268, 0
        %v465 = vsel %vm334, %v269, 0
        %v468 = vsel %vm334, %v270, 0
        %v471 = vsel %vm334, %v271, 0
        %v474 = vsel %vm334, %v272, 0
        %v477 = vsel %vm334, %v273, 0
        %v480 = vsel %vm334, %v274, 0
        %v483 = vsel %vm334, %v275, 0
        %v486 = vsel %vm334, %v276, 0
        %v489 = vsel %vm334, %v277, 0
        %v492 = vsel %vm334, %v278, 0
        %v495 = vsel %vm334, %v279, 0
        %v498 = vsel %vm334, %v280, 0
        %v501 = vsel %vm334, %v281, 0
        %v504 = vsel %vm334, %v282, 0
        %v507 = vsel %vm334, %v283, 0
        %v510 = vsel %vm334, %v284, 0
        %v513 = vsel %vm334, %v285, 0
        %v516 = vsel %vm334, %v286, 0
        %v519 = vsel %vm334, %v287, 0
        %v522 = vsel %vm334, %v288, 0
        %v525 = vsel %vm334, %v289, 0
        %v528 = vsel %vm334, %v290, 0
        %v531 = vsel %vm334, %v291, 0
        %v534 = vsel %vm334, %v292, 0
        %v537 = vsel %vm334, %v293, 0
        %v540 = vsel %vm334, %v294, 0
        %v543 = vsel %vm334, %v295, 0
        %v546 = vsel %vm334, %v296, 0
        %v549 = vsel %vm334, %v297, 0
        %v552 = vsel %vm334, %v298, 0
        %v555 = vsel %vm334, %v299, 0
        %v558 = vsel %vm334, %v300, 0
        %v561 = vsel %vm334, %v301, 0
        %v564 = vsel %vm334, %v302, 0
        %v567 = vsel %vm334, %v303, 0
        %v570 = vsel %vm334, %v304, 0
        %v573 = vsel %vm334, %v305, 0
        %v576 = vsel %vm334, %v306, 0
        %578 = vmatprep.subr.mxu0 0.0
        %579 = vmatpush1.xpose.msra.mxu0 %v339
        %580 = vmatprep.subr.mxu0 0.0
        %581 = vmatpush1.xpose.msra.mxu0 %v342
        %582 = vmatprep.subr.mxu0 0.0
        %583 = vmatpush1.xpose.msra.mxu0 %v345
        %584 = vmatprep.subr.mxu0 0.0
        %585 = vmatpush1.xpose.msra.mxu0 %v348
        %586 = vmatprep.subr.mxu0 0.0
        %587 = vmatpush1.xpose.msra.mxu0 %v351
        %588 = vmatprep.subr.mxu0 0.0
        %589 = vmatpush1.xpose.msra.mxu0 %v354
        %590 = vmatprep.subr.mxu0 0.0
        %591 = vmatpush1.xpose.msra.mxu0 %v357
        %592 = vmatprep.subr.mxu0 0.0
        %593 = vmatpush1.xpose.msra.mxu0 %v360
        %594 = vmatprep.subr.mxu0 0.0
        %595 = vmatpush1.xpose.msra.mxu0 %v363
        %596 = vmatprep.subr.mxu0 0.0
        %597 = vmatpush1.xpose.msra.mxu0 %v366
        %598 = vmatprep.subr.mxu0 0.0
        %599 = vmatpush1.xpose.msra.mxu0 %v369
        %600 = vmatprep.subr.mxu0 0.0
        %601 = vmatpush1.xpose.msra.mxu0 %v372
        %602 = vmatprep.subr.mxu0 0.0
        %603 = vmatpush1.xpose.msra.mxu0 %v375
        %604 = vmatprep.subr.mxu0 0.0
        %605 = vmatpush1.xpose.msra.mxu0 %v378
        %606 = vmatprep.subr.mxu0 0.0
        %607 = vmatpush1.xpose.msra.mxu0 %v381
        %608 = vmatprep.subr.mxu0 0.0
        %609 = vmatpush1.xpose.msra.mxu0 %v384
        %610 = vmatprep.subr.mxu0 0.0
        %611 = vmatpush1.xpose.msra.mxu0 %v387
        %612 = vmatprep.subr.mxu0 0.0
        %613 = vmatpush1.xpose.msra.mxu0 %v390
        %614 = vmatprep.subr.mxu0 0.0
        %615 = vmatpush1.xpose.msra.mxu0 %v393
        %616 = vmatprep.subr.mxu0 0.0
        %617 = vmatpush1.xpose.msra.mxu0 %v396
        %618 = vmatprep.subr.mxu0 0.0
        %619 = vmatpush1.xpose.msra.mxu0 %v399
        %620 = vmatprep.subr.mxu0 0.0
        %621 = vmatpush1.xpose.msra.mxu0 %v402
        %622 = vmatprep.subr.mxu0 0.0
        %623 = vmatpush1.xpose.msra.mxu0 %v405
        %624 = vmatprep.subr.mxu0 0.0
        %625 = vmatpush1.xpose.msra.mxu0 %v408
        %626 = vmatprep.subr.mxu0 0.0
        %627 = vmatpush1.xpose.msra.mxu0 %v411
        %628 = vmatprep.subr.mxu0 0.0
        %629 = vmatpush1.xpose.msra.mxu0 %v414
        %630 = vmatprep.subr.mxu0 0.0
        %631 = vmatpush1.xpose.msra.mxu0 %v417
        %632 = vmatprep.subr.mxu0 0.0
        %633 = vmatpush1.xpose.msra.mxu0 %v420
        %634 = vmatprep.subr.mxu0 0.0
        %635 = vmatpush1.xpose.msra.mxu0 %v423
        %636 = vmatprep.subr.mxu0 0.0
        %637 = vmatpush1.xpose.msra.mxu0 %v426
        %638 = vmatprep.subr.mxu0 0.0
        %639 = vmatpush1.xpose.msra.mxu0 %v429
        %640 = vmatprep.subr.mxu0 0.0
        %641 = vmatpush1.xpose.msra.mxu0 %v432
        %642 = vmatprep.mubr.f32.mxu0 0.0
        %643 = vmatmul.mubr.f32.gmra.mrb[0].mxu0 %v336
        %v644 = vpop.f32.mrb[0].mxu0
        %v645 = vadd.f32 %v312, %v644
        %v646 = vpop.f32.mrb[0].mxu0
        %v647 = vadd.f32 %v316, %v646
        %648 = vdwg.mxu0
        %649 = vmatprep.subr.mxu0 0.0
        %650 = vmatpush1.xpose.msra.mxu0 %v435
        %651 = vmatprep.subr.mxu0 0.0
        %652 = vmatpush1.xpose.msra.mxu0 %v438
        %653 = vmatprep.subr.mxu0 0.0
        %654 = vmatpush1.xpose.msra.mxu0 %v441
        %655 = vmatprep.subr.mxu0 0.0
        %656 = vmatpush1.xpose.msra.mxu0 %v444
        %657 = vmatprep.subr.mxu0 0.0
        %658 = vmatpush1.xpose.msra.mxu0 %v447
        %659 = vmatprep.subr.mxu0 0.0
        %660 = vmatpush1.xpose.msra.mxu0 %v450
        %661 = vmatprep.subr.mxu0 0.0
        %662 = vmatpush1.xpose.msra.mxu0 %v453
        %663 = vmatprep.subr.mxu0 0.0
        %664 = vmatpush1.xpose.msra.mxu0 %v456
        %665 = vmatprep.subr.mxu0 0.0
        %666 = vmatpush1.xpose.msra.mxu0 %v459
        %667 = vmatprep.subr.mxu0 0.0
        %668 = vmatpush1.xpose.msra.mxu0 %v462
        %669 = vmatprep.subr.mxu0 0.0
        %670 = vmatpush1.xpose.msra.mxu0 %v465
        %671 = vmatprep.subr.mxu0 0.0
        %672 = vmatpush1.xpose.msra.mxu0 %v468
        %673 = vmatprep.subr.mxu0 0.0
        %674 = vmatpush1.xpose.msra.mxu0 %v471
        %675 = vmatprep.subr.mxu0 0.0
        %676 = vmatpush1.xpose.msra.mxu0 %v474
        %677 = vmatprep.subr.mxu0 0.0
        %678 = vmatpush1.xpose.msra.mxu0 %v477
        %679 = vmatprep.subr.mxu0 0.0
        %680 = vmatpush1.xpose.msra.mxu0 %v480
        %681 = vmatprep.subr.mxu0 0.0
        %682 = vmatpush1.xpose.msra.mxu0 %v483
        %683 = vmatprep.subr.mxu0 0.0
        %684 = vmatpush1.xpose.msra.mxu0 %v486
        %685 = vmatprep.subr.mxu0 0.0
        %686 = vmatpush1.xpose.msra.mxu0 %v489
        %687 = vmatprep.subr.mxu0 0.0
        %688 = vmatpush1.xpose.msra.mxu0 %v492
        %689 = vmatprep.subr.mxu0 0.0
        %690 = vmatpush1.xpose.msra.mxu0 %v495
        %691 = vmatprep.subr.mxu0 0.0
        %692 = vmatpush1.xpose.msra.mxu0 %v498
        %693 = vmatprep.subr.mxu0 0.0
        %694 = vmatpush1.xpose.msra.mxu0 %v501
        %695 = vmatprep.subr.mxu0 0.0
        %696 = vmatpush1.xpose.msra.mxu0 %v504
        %697 = vmatprep.subr.mxu0 0.0
        %698 = vmatpush1.xpose.msra.mxu0 %v507
        %699 = vmatprep.subr.mxu0 0.0
        %700 = vmatpush1.xpose.msra.mxu0 %v510
        %701 = vmatprep.subr.mxu0 0.0
        %702 = vmatpush1.xpose.msra.mxu0 %v513
        %703 = vmatprep.subr.mxu0 0.0
        %704 = vmatpush1.xpose.msra.mxu0 %v516
        %705 = vmatprep.subr.mxu0 0.0
        %706 = vmatpush1.xpose.msra.mxu0 %v519
        %707 = vmatprep.subr.mxu0 0.0
        %708 = vmatpush1.xpose.msra.mxu0 %v522
        %709 = vmatprep.subr.mxu0 0.0
        %710 = vmatpush1.xpose.msra.mxu0 %v525
        %711 = vmatprep.subr.mxu0 0.0
        %712 = vmatpush1.xpose.msra.mxu0 %v528
        %713 = vmatprep.mubr.f32.mxu0 0.0
        %714 = vmatmul.mubr.f32.gmra.mrb[0].mxu0 %v336
        %v715 = vpop.f32.mrb[0].mxu0
        %v716 = vadd.f32 %v320, %v715
        %v717 = vpop.f32.mrb[0].mxu0
        %v718 = vadd.f32 %v324, %v717
        %719 = vdwg.mxu0
        %720 = vmatprep.subr.mxu0 0.0
        %721 = vmatpush1.xpose.msra.mxu0 %v531
        %722 = vmatprep.subr.mxu0 0.0
        %723 = vmatpush1.xpose.msra.mxu0 %v534
        %724 = vmatprep.subr.mxu0 0.0
        %725 = vmatpush1.xpose.msra.mxu0 %v537
        %726 = vmatprep.subr.mxu0 0.0
        %727 = vmatpush1.xpose.msra.mxu0 %v540
        %728 = vmatprep.subr.mxu0 0.0
        %729 = vmatpush1.xpose.msra.mxu0 %v543
        %730 = vmatprep.subr.mxu0 0.0
        %731 = vmatpush1.xpose.msra.mxu0 %v546
        %732 = vmatprep.subr.mxu0 0.0
        %733 = vmatpush1.xpose.msra.mxu0 %v549
        %734 = vmatprep.subr.mxu0 0.0
        %735 = vmatpush1.xpose.msra.mxu0 %v552
        %736 = vmatprep.subr.mxu0 0.0
        %737 = vmatpush1.xpose.msra.mxu0 %v555
        %738 = vmatprep.subr.mxu0 0.0
        %739 = vmatpush1.xpose.msra.mxu0 %v558
        %740 = vmatprep.subr.mxu0 0.0
        %741 = vmatpush1.xpose.msra.mxu0 %v561
        %742 = vmatprep.subr.mxu0 0.0
        %743 = vmatpush1.xpose.msra.mxu0 %v564
        %744 = vmatprep.subr.mxu0 0.0
        %745 = vmatpush1.xpose.msra.mxu0 %v567
        %746 = vmatprep.subr.mxu0 0.0
        %747 = vmatpush1.xpose.msra.mxu0 %v570
        %748 = vmatprep.subr.mxu0 0.0
        %749 = vmatpush1.xpose.msra.mxu0 %v573
        %750 = vmatprep.subr.mxu0 0.0
        %751 = vmatpush1.xpose.msra.mxu0 %v576
        %752 = vmatprep.subr.mxu0 0.0
        %753 = vmatpush1.xpose.msra.mxu0 0.0
        %754 = vmatprep.subr.mxu0 0.0
        %755 = vmatpush1.xpose.msra.mxu0 0.0
        %756 = vmatprep.subr.mxu0 0.0
        %757 = vmatpush1.xpose.msra.mxu0 0.0
        %758 = vmatprep.subr.mxu0 0.0
        %759 = vmatpush1.xpose.msra.mxu0 0.0
        %760 = vmatprep.subr.mxu0 0.0
        %761 = vmatpush1.xpose.msra.mxu0 0.0
        %762 = vmatprep.subr.mxu0 0.0
        %763 = vmatpush1.xpose.msra.mxu0 0.0
        %764 = vmatprep.subr.mxu0 0.0
        %765 = vmatpush1.xpose.msra.mxu0 0.0
        %766 = vmatprep.subr.mxu0 0.0
        %767 = vmatpush1.xpose.msra.mxu0 0.0
        %768 = vmatprep.subr.mxu0 0.0
        %769 = vmatpush1.xpose.msra.mxu0 0.0
        %770 = vmatprep.subr.mxu0 0.0
        %771 = vmatpush1.xpose.msra.mxu0 0.0
        %772 = vmatprep.subr.mxu0 0.0
        %773 = vmatpush1.xpose.msra.mxu0 0.0
        %774 = vmatprep.subr.mxu0 0.0
        %775 = vmatpush1.xpose.msra.mxu0 0.0
        %776 = vmatprep.subr.mxu0 0.0
        %777 = vmatpush1.xpose.msra.mxu0 0.0
        %778 = vmatprep.subr.mxu0 0.0
        %779 = vmatpush1.xpose.msra.mxu0 0.0
        %780 = vmatprep.subr.mxu0 0.0
        %781 = vmatpush1.xpose.msra.mxu0 0.0
        %782 = vmatprep.subr.mxu0 0.0
        %783 = vmatpush1.xpose.msra.mxu0 0.0
        %784 = vmatprep.mubr.f32.mxu0 0.0
        %785 = vmatmul.mubr.f32.gmra.mrb[0].mxu0 %v336
        %v786 = vpop.f32.mrb[0].mxu0
        %v787 = vadd.f32 %v328, %v786
        %v788 = vpop.f32.mrb[0].mxu0
        %789 = vdwg.mxu0
        %s790 = smul.u32 %s22, 5
        %s791 = smul.addr %s790, 8
        %s792 = scalar_lea.vmem [#allocation2], %s791
        %793 = vst [vmem:[%s792] sm:$0xff] %v645
        %794 = vst [vmem:[%s792 + $0x8] sm:$0xff] %v647
        %795 = vst [vmem:[%s792 + $0x10] sm:$0xff] %v716
        %796 = vst [vmem:[%s792 + $0x18] sm:$0xff] %v718
        %797 = vst [vmem:[%s792 + $0x20] sm:$0xff] %v787
        %v798 = vld [vmem:[#allocation3] sm:$0xff]
        %v799 = vmax.f32 %v645, %v787
        %v800 = vmax.f32 %v799, %v647
        %v801 = vmax.f32 %v716, %v718
        %v802 = vmax.f32 %v800, %v801
        %803 = vmax.xlane.f32.xlu0 %v802
        %v804 = vpop.xlane.xlu0 %803
        %v805 = vmax.f32 %v798, %v804
        %v806 = vld [vmem:[#allocation4] sm:$0xff]
        %v807 = vsub.f32 %v798, %v805
        %v808 = vmul.f32 %v807, 1.442695
        %v809 = vpow.pop %v808
        %v810 = vmul.f32 %v806, %v809
        %812 = vset.pattern.permute.xlu0 0
        %813 = vperm.xlu0 %812, %v805
        %v814 = vpop.permute.xlu0 %813
        %v816 = vsub.f32 %v645, %v814
        %v817 = vsub.f32 %v647, %v814
        %v818 = vsub.f32 %v716, %v814
        %v819 = vsub.f32 %v718, %v814
        %v820 = vsub.f32 %v787, %v814
        %v821 = vmul.f32 %v816, 1.442695
        %v822 = vpow.pop %v821
        %v823 = vmul.f32 %v817, 1.442695
        %v824 = vpow.pop %v823
        %v825 = vmul.f32 %v818, 1.442695
        %v826 = vpow.pop %v825
        %v827 = vmul.f32 %v819, 1.442695
        %v828 = vpow.pop %v827
        %v829 = vmul.f32 %v820, 1.442695
        %v830 = vpow.pop %v829
        %v831 = vadd.f32 %v822, %v824
        %v832 = vadd.f32 %v831, %v826
        %v833 = vadd.f32 %v832, %v828
        %v834 = vadd.f32 %v833, %v830
        %835 = vadd.xlane.f32.xlu0 %v834
        %v836 = vpop.xlane.xlu0 %835
        %v837 = vadd.f32 %v810, %v836
        %vm838 = vcmask 7168
        %839 = vst.msk [vmem:[#allocation4] sm:$0xff] %vm838, %v837
        %840 = vst.msk [vmem:[#allocation3] sm:$0xff] %vm838, %v805
        // Predicated region
        $region37: #{tpu_custom_call.1} parent=31 // pred_check
          %p841 = pneg %p219
        $region38: #{tpu_custom_call.1} parent=31 // pred_check_branch
          %843 = sbr.rel (%p841) target = $region40
        $region39: #{tpu_custom_call.1} parent=31 // pred_region
          %v844 = vld [vmem:[#allocation3] sm:$0xff]
          %v845 = vld [vmem:[#allocation4] sm:$0xff]
          %v846 = vlog2.pop %v845
          %v847 = vmul.f32 %v846, 0.6931472
          %v848 = vadd.f32 %v844, %v847
          %v849 = vld [vmem:[#allocation2] sm:$0xff]
          %v850 = vld [vmem:[#allocation2 + $0x8] sm:$0xff]
          %v851 = vld [vmem:[#allocation2 + $0x10] sm:$0xff]
          %v852 = vld [vmem:[#allocation2 + $0x18] sm:$0xff]
          %v853 = vld [vmem:[#allocation2 + $0x20] sm:$0xff]
          %855 = vset.pattern.permute.xlu0 0
          %856 = vperm.xlu0 %855, %v848
          %v857 = vpop.permute.xlu0 %856
          %v859 = vsub.f32 %v849, %v857
          %v860 = vsub.f32 %v850, %v857
          %v861 = vsub.f32 %v851, %v857
          %v862 = vsub.f32 %v852, %v857
          %v863 = vsub.f32 %v853, %v857
          %864 = vst [vmem:[%s203] sm:$0xff] %v859
          %865 = vst [vmem:[%s203 + $0x8] sm:$0xff] %v860
          %866 = vst [vmem:[%s203 + $0x10] sm:$0xff] %v861
          %867 = vst [vmem:[%s203 + $0x18] sm:$0xff] %v862
          %868 = vst [vmem:[%s203 + $0x20] sm:$0xff] %v863
        $region40: #{tpu_custom_call.1} parent=31 // pred_fallthru
          _
        %s869 = sand.u32 %s115, 1
        %s870 = scalar_lea.sflag [#allocation6], %s869
        %s871 = sand.u32 %s115, 1
        %s872 = smul.addr %s871, 40
        %s873 = scalar_lea.vmem [#allocation5], %s872
        // Predicated region
        $region41: #{tpu_custom_call.1} parent=31 // pred_check
          %p874 = pneg %p125
        $region42: #{tpu_custom_call.1} parent=31 // pred_check_branch
          %876 = sbr.rel (%p874) target = $region44
        $region43: #{tpu_custom_call.1} parent=31 // pred_region
          %s878 = ssub.s32 640, 640
          %879 = vsyncadd %s870, %s878
          %s880 = smul.addr %s21, 5
          %s881 = smul.addr %s880, 128
          %s882 = scalar_lea.hbm %s3, %s881
          %s884 = sshll.u32 %s873, 4
          %s885 = int_to_ptr.vmem [resolvable:$true] %s884
          %887 = dma.vmem_to_hbm [thread:$0]  %s885, 640, %s882, %s870
        $region44: #{tpu_custom_call.1} parent=31 // pred_fallthru
          _
      $region32: #{tpu_custom_call.1} parent=5 // pred_fallthru
        _
      %p888 = scmp.le.s32.totalorder 2, %s12
      // Predicated region
      $region45: #{tpu_custom_call.1} parent=5 // pred_check
        %p889 = pneg %p888
      $region46: #{tpu_custom_call.1} parent=5 // pred_check_branch
        %891 = sbr.rel (%p889) target = $region48
      $region47: #{tpu_custom_call.1} parent=5 // pred_region
        %s892 = ssub.s32 %s12, 2
        // Predicated region
        $region49: #{tpu_custom_call.1} parent=47 // pred_check
          %p893 = pneg %p131
        $region50: #{tpu_custom_call.1} parent=47 // pred_check_branch
          %895 = sbr.rel (%p893) target = $region52
        $region51: #{tpu_custom_call.1} parent=47 // pred_region
          %s896 = sand.u32 %s116, 1
          %s897 = scalar_lea.sflag [#allocation6], %s896
          %s898 = sand.u32 %s116, 1
          %s899 = smul.addr %s898, 40
          %s900 = scalar_lea.vmem [#allocation5], %s899
          %901 = dma.done %s897, 640
        $region52: #{tpu_custom_call.1} parent=47 // pred_fallthru
          _
      $region48: #{tpu_custom_call.1} parent=5 // pred_fallthru
        _
    $region6: #{tpu_custom_call.1} parent=1 // loop_footer
      %s16 = sadd.s32 1, %s12
    $region7: #{tpu_custom_call.1} parent=1 // loop_footer_branch
      %11 = sbr.rel target = $region3
    $region8: #{tpu_custom_call.1} parent=1 // loop_exit
      _
    %902 = vsyncpa [#allocation6], 1
    %s903 = scalar_lea.sflag [#allocation6], 1
    %904 = vsyncpa %s903, 1

</llo_original>
